<compile_context>
chip_gen: v7x
topology: tpu7x:2x2x1
jax: 0.10.0
libtpu: 0.0.40
codegen_flags: <defaults>
</compile_context>

<pallas_src>
import math

import jax
import jax.numpy as jnp
from jax.experimental import pallas as pl
from jax.experimental.pallas import tpu as pltpu

IN_DIM = 10
HID_DIM = 5
OUT_DIM = 2

# Large default batch tile (multiple of 128).  A (16-sublane-padded, 32768) f32 x tile is
# 2 MiB; triple-buffered x (6 MiB) + double-buffered out (2 MiB) + weights fits every
# generation's scoped-VMEM budget with lots of headroom.
DEFAULT_TB = 32768
# When the batch is large, keep at least this many grid steps so both v7x TensorCores get
# work and the pipeline has steps to overlap.
_MIN_GRID_STEPS = 4


def _mlp_kernel(xT_ref, w1_ref, b1_ref, w2_ref, b2_ref, oT_ref):
    # Layer 1: W1(5,10) @ x^T(10,tb) -> (5,tb); f32 accumulate on the MXU.
    h = jnp.dot(w1_ref[...], xT_ref[...], preferred_element_type=jnp.float32)
    h = jnp.maximum(h + b1_ref[...], jnp.float32(0.0))  # b1 (5,1) broadcasts over lanes
    # Layer 2: W2(2,5) @ h(5,tb) -> (2,tb).
    y = jnp.dot(w2_ref[...], h, preferred_element_type=jnp.float32)
    # Lane-dense store: last dim is the batch tile -> unmasked vst.
    oT_ref[...] = (y + b2_ref[...]).astype(oT_ref.dtype)


def _choose_tb(batch, requested):
    """Pick a safe batch tile: full-extent for small B, else a multiple of 128 with
    at least _MIN_GRID_STEPS grid steps when the batch is large enough."""
    if requested is None:
        requested = DEFAULT_TB
    if batch <= requested:
        # Single full-extent block: block dim == array dim satisfies the (8,128) rule.
        return batch
    tb = min(requested, max(128, batch // _MIN_GRID_STEPS))
    tb = max(128, (tb // 128) * 128)  # clamp to a multiple of 128 (lane axis)
    return tb


def simple_feedforward_nn_feature_major(xT, w1, b1, w2, b2, *, tb=None):
    """Feature-major forward: xT is (10, B), returns y^T of shape (2, B).

    No HBM transpose passes — use this entry point when activations are kept
    feature-major end-to-end.
    """
    in_dim, B = xT.shape
    assert in_dim == IN_DIM, f"expected {IN_DIM} input features, got {in_dim}"
    tb = _choose_tb(B, tb)
    num_steps = pl.cdiv(B, tb)

    b1c = b1.reshape(HID_DIM, 1)
    b2c = b2.reshape(OUT_DIM, 1)

    # 3-deep input buffering only pays off when there are enough grid steps.
    x_spec_kwargs = {}
    if num_steps >= 3:
        x_spec_kwargs["pipeline_mode"] = pl.Buffered(3)

    flops = 2 * B * (IN_DIM * HID_DIM + HID_DIM * OUT_DIM)
    bytes_accessed = (
        B * (IN_DIM + OUT_DIM) * 4
        + (HID_DIM * IN_DIM + HID_DIM + OUT_DIM * HID_DIM + OUT_DIM) * 4
    )

    yT = pl.pallas_call(
        _mlp_kernel,
        out_shape=jax.ShapeDtypeStruct((OUT_DIM, B), xT.dtype),
        grid_spec=pltpu.PrefetchScalarGridSpec(
            num_scalar_prefetch=0,
            grid=(num_steps,),
            in_specs=[
                # x^T: march along the batch (lane) axis; pipelined by BlockSpec.
                pl.BlockSpec((IN_DIM, tb), lambda i: (0, i), **x_spec_kwargs),
                # Weights / biases: constant index_map -> VMEM-resident across steps.
                pl.BlockSpec((HID_DIM, IN_DIM), lambda i: (0, 0)),
                pl.BlockSpec((HID_DIM, 1), lambda i: (0, 0)),
                pl.BlockSpec((OUT_DIM, HID_DIM), lambda i: (0, 0)),
                pl.BlockSpec((OUT_DIM, 1), lambda i: (0, 0)),
            ],
            out_specs=pl.BlockSpec((OUT_DIM, tb), lambda i: (0, i)),
        ),
        compiler_params=pltpu.CompilerParams(
            # Batch tiles are independent -> shard grid steps across v7x's two TensorCores.
            dimension_semantics=("parallel",),
            # Explicit scoped-VMEM budget; safe ceiling on v5e/v6e/v7x (v7x: 64 MiB physical).
            vmem_limit_bytes=32 * 1024 * 1024,
        ),
        cost_estimate=pl.CostEstimate(
            flops=flops, transcendentals=0, bytes_accessed=bytes_accessed
        ),
    )(xT, w1, b1c, w2, b2c)

    return yT  # (OUT_DIM, B)


def simple_feedforward_nn(x, w1, b1, w2, b2, *, tb=None):
    """PyTorch-interface-compatible forward.

    x:  (B, 10) f32
    w1: (5, 10) f32   (PyTorch layer1.weight layout)
    b1: (5,)    f32
    w2: (2, 5)  f32   (PyTorch layer2.weight layout)
    b2: (2,)    f32
    Returns (B, 2) f32.

    Note: the x.T / y.T here are layout plumbing outside the kernel; if your pipeline keeps
    activations feature-major, call simple_feedforward_nn_feature_major directly to avoid
    the extra HBM transpose passes.
    """
    yT = simple_feedforward_nn_feature_major(x.T, w1, b1, w2, b2, tb=tb)
    return yT.T  # (B, OUT_DIM)


def init_params(key):
    """Deterministic init mirroring nn.Linear's default U(-1/sqrt(fan_in), 1/sqrt(fan_in)).

    Weights are in PyTorch-native (out_features, in_features) layout.
    """
    k1, k2, k3, k4 = jax.random.split(key, 4)
    bound1 = 1.0 / math.sqrt(IN_DIM)
    bound2 = 1.0 / math.sqrt(HID_DIM)
    w1 = jax.random.uniform(k1, (HID_DIM, IN_DIM), jnp.float32, -bound1, bound1)
    b1 = jax.random.uniform(k2, (HID_DIM,), jnp.float32, -bound1, bound1)
    w2 = jax.random.uniform(k3, (OUT_DIM, HID_DIM), jnp.float32, -bound2, bound2)
    b2 = jax.random.uniform(k4, (OUT_DIM,), jnp.float32, -bound2, bound2)
    return w1, b1, w2, b2


def _reference(x, w1, b1, w2, b2):
    # Same math as the PyTorch forward: relu(x @ W1^T + b1) @ W2^T + b2.
    return jnp.maximum(x @ w1.T + b1, 0.0) @ w2.T + b2


if __name__ == "__main__":
    key = jax.random.PRNGKey(0)
    k_params, k_x1, k_x2, k_x3 = jax.random.split(key, 4)
    w1, b1, w2, b2 = init_params(k_params)

    # 1) Small batch: single full-extent block.
    B1 = 8
    x1 = jax.random.normal(k_x1, (B1, IN_DIM), dtype=jnp.float32)
    out1 = jax.block_until_ready(simple_feedforward_nn(x1, w1, b1, w2, b2))
    assert out1.shape == (B1, OUT_DIM)
    assert jnp.allclose(out1, _reference(x1, w1, b1, w2, b2), atol=1e-5, rtol=1e-5)

    # 2) Gridded batch (2 steps of tb=128): multi-step pipeline + "parallel" grid axis.
    B2 = 256
    x2 = jax.random.normal(k_x2, (B2, IN_DIM), dtype=jnp.float32)
    out2 = jax.block_until_ready(simple_feedforward_nn(x2, w1, b1, w2, b2, tb=128))
    assert out2.shape == (B2, OUT_DIM)
    assert jnp.allclose(out2, _reference(x2, w1, b1, w2, b2), atol=1e-5, rtol=1e-5)

    # 3) Feature-major entry point (no wrapper transposes) with >=3 grid steps so the
    #    Buffered(3) input pipeline path is exercised.
    B3 = 640
    x3 = jax.random.normal(k_x3, (B3, IN_DIM), dtype=jnp.float32)
    xT3 = x3.T  # a feature-major producer would hand us this layout directly
    yT3 = jax.block_until_ready(
        simple_feedforward_nn_feature_major(xT3, w1, b1, w2, b2, tb=128)
    )
    assert yT3.shape == (OUT_DIM, B3)
    assert jnp.allclose(yT3.T, _reference(x3, w1, b1, w2, b2), atol=1e-5, rtol=1e-5)

    print("KERNEL_OK")
</pallas_src>

<mosaic_0001>
module attributes {stable_mosaic.version = 11 : i64} {
  func.func @_mlp_kernel(%arg0: i32, %arg1: memref<10x8xf32, #tpu.memory_space<vmem>>, %arg2: memref<5x10xf32, #tpu.memory_space<vmem>>, %arg3: memref<5x1xf32, #tpu.memory_space<vmem>>, %arg4: memref<2x5xf32, #tpu.memory_space<vmem>>, %arg5: memref<2x1xf32, #tpu.memory_space<vmem>>, %arg6: memref<2x8xf32, #tpu.memory_space<vmem>>) attributes {dimension_semantics = [#tpu.dimension_semantics<parallel>], iteration_bounds = array<i64: 1>, scalar_prefetch = 0 : i64, scratch_operands = 0 : i64, tpu.core_type = #tpu.core_type<tc>, window_params = [{transform_indices = @transform_0, window_bounds = array<i64: 10, 8>}, {pipeline_mode = #tpu.pipeline_mode<synchronous>, transform_indices = @transform_1, window_bounds = array<i64: 5, 10>}, {pipeline_mode = #tpu.pipeline_mode<synchronous>, transform_indices = @transform_2, window_bounds = array<i64: 5, 1>}, {pipeline_mode = #tpu.pipeline_mode<synchronous>, transform_indices = @transform_3, window_bounds = array<i64: 2, 5>}, {pipeline_mode = #tpu.pipeline_mode<synchronous>, transform_indices = @transform_4, window_bounds = array<i64: 2, 1>}, {transform_indices = @transform_5, window_bounds = array<i64: 2, 8>}]} {
    %c0 = arith.constant 0 : index
    %c0_0 = arith.constant 0 : index
    %0 = vector.load %arg2[%c0, %c0_0] : memref<5x10xf32, #tpu.memory_space<vmem>>, vector<5x10xf32>
    %c0_1 = arith.constant 0 : index
    %c0_2 = arith.constant 0 : index
    %1 = vector.load %arg1[%c0_1, %c0_2] : memref<10x8xf32, #tpu.memory_space<vmem>>, vector<10x8xf32>
    %cst = arith.constant dense<0.000000e+00> : vector<5x8xf32>
    %2 = tpu.matmul %0, %1, %cst {dimension_numbers = #tpu.dot_dimension_numbers<[1], [0], [0], [1], [0, 0, 1, 1], [], []>} : vector<5x10xf32>, vector<10x8xf32>, vector<5x8xf32> -> vector<5x8xf32>
    %c0_3 = arith.constant 0 : index
    %c0_4 = arith.constant 0 : index
    %3 = vector.load %arg3[%c0_3, %c0_4] : memref<5x1xf32, #tpu.memory_space<vmem>>, vector<5x1xf32>
    %4 = vector.broadcast %3 : vector<5x1xf32> to vector<5x8xf32>
    %5 = arith.addf %2, %4 : vector<5x8xf32>
    %cst_5 = arith.constant 0.000000e+00 : f32
    %6 = vector.broadcast %cst_5 : f32 to vector<5x8xf32>
    %7 = arith.maximumf %5, %6 : vector<5x8xf32>
    %c0_6 = arith.constant 0 : index
    %c0_7 = arith.constant 0 : index
    %8 = vector.load %arg4[%c0_6, %c0_7] : memref<2x5xf32, #tpu.memory_space<vmem>>, vector<2x5xf32>
    %cst_8 = arith.constant dense<0.000000e+00> : vector<2x8xf32>
    %9 = tpu.matmul %8, %7, %cst_8 {dimension_numbers = #tpu.dot_dimension_numbers<[1], [0], [0], [1], [0, 0, 1, 1], [], []>} : vector<2x5xf32>, vector<5x8xf32>, vector<2x8xf32> -> vector<2x8xf32>
    %c0_9 = arith.constant 0 : index
    %c0_10 = arith.constant 0 : index
    %10 = vector.load %arg5[%c0_9, %c0_10] : memref<2x1xf32, #tpu.memory_space<vmem>>, vector<2x1xf32>
    %11 = vector.broadcast %10 : vector<2x1xf32> to vector<2x8xf32>
    %12 = arith.addf %9, %11 : vector<2x8xf32>
    %c0_11 = arith.constant 0 : index
    %c0_12 = arith.constant 0 : index
    %13 = vector.load %arg6[%c0_11, %c0_12] : memref<2x8xf32, #tpu.memory_space<vmem>>, vector<2x8xf32>
    tpu.vector_store %arg6[%c0_11, %c0_12], %12 {strides = array<i32>} : memref<2x8xf32, #tpu.memory_space<vmem>>, vector<2x8xf32>,
    return
  }
  func.func @transform_0(%arg0: i32) -> (i32, i32) {
    %c0_i32 = arith.constant 0 : i32
    %c0_i32_0 = arith.constant 0 : i32
    return %c0_i32, %arg0 : i32, i32
  }
  func.func @transform_1(%arg0: i32) -> (i32, i32) {
    %c0_i32 = arith.constant 0 : i32
    %c0_i32_0 = arith.constant 0 : i32
    %c0_i32_1 = arith.constant 0 : i32
    return %c0_i32, %c0_i32_0 : i32, i32
  }
  func.func @transform_2(%arg0: i32) -> (i32, i32) {
    %c0_i32 = arith.constant 0 : i32
    %c0_i32_0 = arith.constant 0 : i32
    %c0_i32_1 = arith.constant 0 : i32
    return %c0_i32, %c0_i32_0 : i32, i32
  }
  func.func @transform_3(%arg0: i32) -> (i32, i32) {
    %c0_i32 = arith.constant 0 : i32
    %c0_i32_0 = arith.constant 0 : i32
    %c0_i32_1 = arith.constant 0 : i32
    return %c0_i32, %c0_i32_0 : i32, i32
  }
  func.func @transform_4(%arg0: i32) -> (i32, i32) {
    %c0_i32 = arith.constant 0 : i32
    %c0_i32_0 = arith.constant 0 : i32
    %c0_i32_1 = arith.constant 0 : i32
    return %c0_i32, %c0_i32_0 : i32, i32
  }
  func.func @transform_5(%arg0: i32) -> (i32, i32) {
    %c0_i32 = arith.constant 0 : i32
    %c0_i32_0 = arith.constant 0 : i32
    return %c0_i32, %arg0 : i32, i32
  }
}

</mosaic_0001>

<llo_original>
// kernel: tpu_custom_call.1
$region0: #{tpu_custom_call.1}
  #allocation0 [shape = 'u32[]', space=smem, size = 0x4, offset = 0x4, fixed_abs, tag = 'smem constant byte address 0x4 - core index']
  #allocation1 [shape = 'u32[144,128]{1,0:T(1,128)}', space=vmem, size = 0x12000, scoped, tag = 'internal scratch']
  %s0 = inlined_call_operand.vmem [shape: f32[10,8], index: 0, kind: input, shape index: {}]
  %s1 = inlined_call_operand.vmem [shape: f32[5,10], index: 1, kind: input, shape index: {}]
  %s2 = inlined_call_operand.vmem [shape: f32[5,1], index: 2, kind: input, shape index: {}]
  %s3 = inlined_call_operand.vmem [shape: f32[2,5], index: 3, kind: input, shape index: {}]
  %s4 = inlined_call_operand.vmem [shape: f32[2,1], index: 4, kind: input, shape index: {}]
  %s5 = inlined_call_operand.hbm [shape: f32[2,8], index: 5, kind: output, shape index: {}]
  %s6 = sld [smem:[#allocation0]]
  $region30: #{tpu_custom_call.1} parent=0
    _
  %s8 = ssub.s32 1, %s6
  %s9 = scalar_select 0, %s8, %s6
  $region1: #{tpu_custom_call.1} parent=0
    #allocation2 [shape = 'u8[1024]{0}', space=vmem, size = 0x400, scoped, tag = 'output window, operand 0, single buffered']
    #allocation3 [shape = 's32[1]{0}', space=sflag, size = 0x4, scoped, tag = 'scoped memory for tpu_custom_call.1']
    %10 = vsyncpa [#allocation3], 0
    // Predicated region
    $region2: #{tpu_custom_call.1} parent=1 // pred_check
      _
    $region3: #{tpu_custom_call.1} parent=1 // pred_check_branch
      %12 = sbr.rel (0) target = $region5
    $region4: #{tpu_custom_call.1} parent=1 // pred_region
      _
    $region5: #{tpu_custom_call.1} parent=1 // pred_fallthru
      _
    // Predicated region
    $region6: #{tpu_custom_call.1} parent=1 // pred_check
      _
    $region7: #{tpu_custom_call.1} parent=1 // pred_check_branch
      %14 = sbr.rel (0) target = $region9
    $region8: #{tpu_custom_call.1} parent=1 // pred_region
      _
    $region9: #{tpu_custom_call.1} parent=1 // pred_fallthru
      _
    // Predicated region
    $region10: #{tpu_custom_call.1} parent=1 // pred_check
      _
    $region11: #{tpu_custom_call.1} parent=1 // pred_check_branch
      %16 = sbr.rel (0) target = $region13
    $region12: #{tpu_custom_call.1} parent=1 // pred_region
      _
    $region13: #{tpu_custom_call.1} parent=1 // pred_fallthru
      _
    // Predicated region
    $region14: #{tpu_custom_call.1} parent=1 // pred_check
      _
    $region15: #{tpu_custom_call.1} parent=1 // pred_check_branch
      %18 = sbr.rel (0) target = $region17
    $region16: #{tpu_custom_call.1} parent=1 // pred_region
      _
    $region17: #{tpu_custom_call.1} parent=1 // pred_fallthru
      _
    // Predicated region
    $region18: #{tpu_custom_call.1} parent=1 // pred_check
      _
    $region19: #{tpu_custom_call.1} parent=1 // pred_check_branch
      %20 = sbr.rel (0) target = $region21
    $region20: #{tpu_custom_call.1} parent=1 // pred_region
      _
    $region21: #{tpu_custom_call.1} parent=1 // pred_fallthru
      _
    %v21 = vld [vmem:[%s1] sm:$0x1f]
    %v22 = vld [vmem:[%s0] sm:$0xff]
    %v23 = vld [vmem:[%s0 + $0x8] sm:$0x3]
    %v24 = vld [vmem:[%s2] sm:$0x1f]
    %26 = vset.pattern.permute.xlu0 0
    %27 = vperm.xlu0 %26, %v24
    %v28 = vpop.permute.xlu0 %27
    %vm30 = vcmask 80896
    %v32 = vsel %vm30, %v21, 0
    %vm34 = vcmask 1041408
    %v36 = vsel %vm34, %v23, 0
    %38 = vmatprep.subr.mxu0 0.0
    %39 = vmatpush1.msra.mxu0 %v22
    %40 = vmatprep.subr.mxu0 0.0
    %41 = vmatpush1.msra.mxu0 %v36
    %42 = vmatprep.subr.mxu0 0.0
    %43 = vmatpush1.msra.mxu0 0.0
    %44 = vmatprep.subr.mxu0 0.0
    %45 = vmatpush1.msra.mxu0 0.0
    %46 = vmatprep.subr.mxu0 0.0
    %47 = vmatpush1.msra.mxu0 0.0
    %48 = vmatprep.subr.mxu0 0.0
    %49 = vmatpush1.msra.mxu0 0.0
    %50 = vmatprep.subr.mxu0 0.0
    %51 = vmatpush1.msra.mxu0 0.0
    %52 = vmatprep.subr.mxu0 0.0
    %53 = vmatpush1.msra.mxu0 0.0
    %54 = vmatprep.subr.mxu0 0.0
    %55 = vmatpush1.msra.mxu0 0.0
    %56 = vmatprep.subr.mxu0 0.0
    %57 = vmatpush1.msra.mxu0 0.0
    %58 = vmatprep.subr.mxu0 0.0
    %59 = vmatpush1.msra.mxu0 0.0
    %60 = vmatprep.subr.mxu0 0.0
    %61 = vmatpush1.msra.mxu0 0.0
    %62 = vmatprep.subr.mxu0 0.0
    %63 = vmatpush1.msra.mxu0 0.0
    %64 = vmatprep.subr.mxu0 0.0
    %65 = vmatpush1.msra.mxu0 0.0
    %66 = vmatprep.subr.mxu0 0.0
    %67 = vmatpush1.msra.mxu0 0.0
    %68 = vmatprep.subr.mxu0 0.0
    %69 = vmatpush1.msra.mxu0 0.0
    %70 = vmatprep.subr.mxu0 0.0
    %71 = vmatpush1.msra.mxu0 0.0
    %72 = vmatprep.subr.mxu0 0.0
    %73 = vmatpush1.msra.mxu0 0.0
    %74 = vmatprep.subr.mxu0 0.0
    %75 = vmatpush1.msra.mxu0 0.0
    %76 = vmatprep.subr.mxu0 0.0
    %77 = vmatpush1.msra.mxu0 0.0
    %78 = vmatprep.subr.mxu0 0.0
    %79 = vmatpush1.msra.mxu0 0.0
    %80 = vmatprep.subr.mxu0 0.0
    %81 = vmatpush1.msra.mxu0 0.0
    %82 = vmatprep.subr.mxu0 0.0
    %83 = vmatpush1.msra.mxu0 0.0
    %84 = vmatprep.subr.mxu0 0.0
    %85 = vmatpush1.msra.mxu0 0.0
    %86 = vmatprep.subr.mxu0 0.0
    %87 = vmatpush1.msra.mxu0 0.0
    %88 = vmatprep.subr.mxu0 0.0
    %89 = vmatpush1.msra.mxu0 0.0
    %90 = vmatprep.subr.mxu0 0.0
    %91 = vmatpush1.msra.mxu0 0.0
    %92 = vmatprep.subr.mxu0 0.0
    %93 = vmatpush1.msra.mxu0 0.0
    %94 = vmatprep.subr.mxu0 0.0
    %95 = vmatpush1.msra.mxu0 0.0
    %96 = vmatprep.subr.mxu0 0.0
    %97 = vmatpush1.msra.mxu0 0.0
    %98 = vmatprep.subr.mxu0 0.0
    %99 = vmatpush1.msra.mxu0 0.0
    %100 = vmatprep.subr.mxu0 0.0
    %101 = vmatpush1.msra.mxu0 0.0
    %102 = vmatprep.mubr.f32.mxu0 0.0
    %103 = vmatmul.mubr.f32.gmra.mrb[0].mxu0 %v32
    %v104 = vpop.f32.mrb[0].mxu0
    %v105 = vadd.f32 %v28, %v104
    %v106 = vpop.f32.mrb[0].mxu0
    %107 = vdwg.mxu0
    %v108 = vmax.f32 %v105, 0.0
    %v109 = vld [vmem:[%s3] sm:$0x3]
    %v110 = vld [vmem:[%s4] sm:$0x3]
    %112 = vset.pattern.permute.xlu0 0
    %113 = vperm.xlu0 %112, %v110
    %v114 = vpop.permute.xlu0 %113
    %vm116 = vcmask 39936
    %v118 = vsel %vm116, %v109, 0
    %vm120 = vcmask 1044480
    %v122 = vsel %vm120, %v108, 0
    %124 = vmatprep.subr.mxu0 0.0
    %125 = vmatpush1.msra.mxu0 %v122
    %126 = vmatprep.subr.mxu0 0.0
    %127 = vmatpush1.msra.mxu0 0.0
    %128 = vmatprep.subr.mxu0 0.0
    %129 = vmatpush1.msra.mxu0 0.0
    %130 = vmatprep.subr.mxu0 0.0
    %131 = vmatpush1.msra.mxu0 0.0
    %132 = vmatprep.subr.mxu0 0.0
    %133 = vmatpush1.msra.mxu0 0.0
    %134 = vmatprep.subr.mxu0 0.0
    %135 = vmatpush1.msra.mxu0 0.0
    %136 = vmatprep.subr.mxu0 0.0
    %137 = vmatpush1.msra.mxu0 0.0
    %138 = vmatprep.subr.mxu0 0.0
    %139 = vmatpush1.msra.mxu0 0.0
    %140 = vmatprep.subr.mxu0 0.0
    %141 = vmatpush1.msra.mxu0 0.0
    %142 = vmatprep.subr.mxu0 0.0
    %143 = vmatpush1.msra.mxu0 0.0
    %144 = vmatprep.subr.mxu0 0.0
    %145 = vmatpush1.msra.mxu0 0.0
    %146 = vmatprep.subr.mxu0 0.0
    %147 = vmatpush1.msra.mxu0 0.0
    %148 = vmatprep.subr.mxu0 0.0
    %149 = vmatpush1.msra.mxu0 0.0
    %150 = vmatprep.subr.mxu0 0.0
    %151 = vmatpush1.msra.mxu0 0.0
    %152 = vmatprep.subr.mxu0 0.0
    %153 = vmatpush1.msra.mxu0 0.0
    %154 = vmatprep.subr.mxu0 0.0
    %155 = vmatpush1.msra.mxu0 0.0
    %156 = vmatprep.subr.mxu0 0.0
    %157 = vmatpush1.msra.mxu0 0.0
    %158 = vmatprep.subr.mxu0 0.0
    %159 = vmatpush1.msra.mxu0 0.0
    %160 = vmatprep.subr.mxu0 0.0
    %161 = vmatpush1.msra.mxu0 0.0
    %162 = vmatprep.subr.mxu0 0.0
    %163 = vmatpush1.msra.mxu0 0.0
    %164 = vmatprep.subr.mxu0 0.0
    %165 = vmatpush1.msra.mxu0 0.0
    %166 = vmatprep.subr.mxu0 0.0
    %167 = vmatpush1.msra.mxu0 0.0
    %168 = vmatprep.subr.mxu0 0.0
    %169 = vmatpush1.msra.mxu0 0.0
    %170 = vmatprep.subr.mxu0 0.0
    %171 = vmatpush1.msra.mxu0 0.0
    %172 = vmatprep.subr.mxu0 0.0
    %173 = vmatpush1.msra.mxu0 0.0
    %174 = vmatprep.subr.mxu0 0.0
    %175 = vmatpush1.msra.mxu0 0.0
    %176 = vmatprep.subr.mxu0 0.0
    %177 = vmatpush1.msra.mxu0 0.0
    %178 = vmatprep.subr.mxu0 0.0
    %179 = vmatpush1.msra.mxu0 0.0
    %180 = vmatprep.subr.mxu0 0.0
    %181 = vmatpush1.msra.mxu0 0.0
    %182 = vmatprep.subr.mxu0 0.0
    %183 = vmatpush1.msra.mxu0 0.0
    %184 = vmatprep.subr.mxu0 0.0
    %185 = vmatpush1.msra.mxu0 0.0
    %186 = vmatprep.subr.mxu0 0.0
    %187 = vmatpush1.msra.mxu0 0.0
    %188 = vmatprep.mubr.f32.mxu0 0.0
    %189 = vmatmul.mubr.f32.gmra.mrb[0].mxu0 %v118
    %v190 = vpop.f32.mrb[0].mxu0
    %v191 = vadd.f32 %v114, %v190
    %v192 = vpop.f32.mrb[0].mxu0
    %193 = vdwg.mxu0
    %vm194 = vcmask 58368
    %195 = vst.msk [vmem:[#allocation2] sm:$0x3] %vm194, %v191
    // Predicated region
    $region22: #{tpu_custom_call.1} parent=1 // pred_check
      _
    $region23: #{tpu_custom_call.1} parent=1 // pred_check_branch
      %197 = sbr.rel (0) target = $region25
    $region24: #{tpu_custom_call.1} parent=1 // pred_region
      %s199 = ssub.s32 32, 32
      %200 = vsyncadd [#allocation3], %s199
      %s202 = sshll.u32 [#allocation2], 4
      %s203 = int_to_ptr.vmem [resolvable:$true] %s202
      %205 = dma.vmem_to_hbm [thread:$0]  %s203, 32, %s5, [#allocation3]
    $region25: #{tpu_custom_call.1} parent=1 // pred_fallthru
      _
    // Predicated region
    $region26: #{tpu_custom_call.1} parent=1 // pred_check
      _
    $region27: #{tpu_custom_call.1} parent=1 // pred_check_branch
      %207 = sbr.rel (0) target = $region29
    $region28: #{tpu_custom_call.1} parent=1 // pred_region
      %208 = dma.done [#allocation3], 32
    $region29: #{tpu_custom_call.1} parent=1 // pred_fallthru
      _
    %209 = vsyncpa [#allocation3], 1

</llo_original>
